<compile_context>
chip_gen: v5e
topology: v5e:2x2
jax: 0.10.0
libtpu: 0.0.40
codegen_flags: <defaults>
</compile_context>

<pallas_src>
import functools

import jax
import jax.numpy as jnp
from jax.experimental import pallas as pl
from jax.experimental.pallas import tpu as pltpu

LANE = 128      # TPU lane width (last-dim vreg width)
SUBLANE = 8     # TPU sublane width (second-to-last dim)


def _round_up(n, m):
    return ((n + m - 1) // m) * m


def linear_kernel(x_ref, w_ref, b_ref, o_ref):
    # Single-tile matmul on the MXU (f32 accumulate) + bias broadcast on VPU.
    acc = jnp.dot(x_ref[...], w_ref[...], preferred_element_type=jnp.float32)
    o_ref[...] = (acc + b_ref[...]).astype(o_ref.dtype)


def prepare_params(w_pt, b):
    """One-time parameter prep (init-time, NOT per forward call).

    w_pt: (OUT, IN) f32 weight in PyTorch nn.Linear layout.
    b:    (OUT,)    f32 bias.
    Returns (w_t, b_p): weight transposed to (IN_P, OUT_P) and bias reshaped
    to (1, OUT_P), both zero-padded to lane-dense widths.
    """
    OUT, IN = w_pt.shape
    IN_P = _round_up(IN, LANE)
    OUT_P = _round_up(OUT, LANE)
    w_t = jnp.pad(jnp.transpose(w_pt), ((0, IN_P - IN), (0, OUT_P - OUT)))
    b_p = jnp.pad(b.reshape(1, OUT), ((0, 0), (0, OUT_P - OUT)))
    return w_t, b_p


@functools.partial(jax.jit, static_argnames=("out_features",))
def torchnet_forward(x, w_t, b_p, *, out_features):
    """Forward of TorchNet: returns x @ W.T + b, shape (B, out_features).

    x:   (B, IN)       f32 input batch.
    w_t: (IN_P, OUT_P) pre-transposed, pre-padded weight from prepare_params.
    b_p: (1, OUT_P)    pre-padded bias from prepare_params.
    """
    B, IN = x.shape
    IN_P, OUT_P = w_t.shape
    B_P = _round_up(B, SUBLANE)

    # Pad the activations to a hardware-friendly, lane-dense tile (exact).
    x_p = jnp.pad(x, ((0, B_P - B), (0, IN_P - IN)))

    cost = pl.CostEstimate(
        flops=2 * B_P * IN_P * OUT_P,
        transcendentals=0,
        bytes_accessed=4 * (B_P * IN_P + IN_P * OUT_P + OUT_P + B_P * OUT_P),
    )

    out_p = pl.pallas_call(
        linear_kernel,
        out_shape=jax.ShapeDtypeStruct((B_P, OUT_P), x.dtype),
        in_specs=[
            pl.BlockSpec(memory_space=pltpu.MemorySpace.VMEM),
            pl.BlockSpec(memory_space=pltpu.MemorySpace.VMEM),
            pl.BlockSpec(memory_space=pltpu.MemorySpace.VMEM),
        ],
        out_specs=pl.BlockSpec(memory_space=pltpu.MemorySpace.VMEM),
        cost_estimate=cost,
    )(x_p, w_t, b_p)

    # TODO(synk): for production batch sizes, switch to a batch-only grid
    # (batch tile 512-1024 rows, weight/bias blocks resident via
    # index_map=lambda i: (0, 0), dimension_semantics=("parallel",)) so v7x's
    # two TensorCores split the batch; size VMEM against the 64 MiB v7x
    # budget, and optionally cast x/w_t to bf16 (f32 accumulate, batch padded
    # to 16) on v6e/v7x once the layer is compute/DMA-bound.
    return out_p[:B, :out_features]


if __name__ == "__main__":
    IN_FEATURES = 100
    OUT_FEATURES = 10
    BATCH = 8

    key = jax.random.PRNGKey(0)
    kx, kw, kb = jax.random.split(key, 3)

    # Deterministic parameter init mimicking torch.nn.Linear's
    # U(-1/sqrt(fan_in), 1/sqrt(fan_in)) initialization.
    bound = 1.0 / jnp.sqrt(jnp.float32(IN_FEATURES))
    w_pt = jax.random.uniform(
        kw, (OUT_FEATURES, IN_FEATURES), jnp.float32, -bound, bound
    )  # PyTorch layout (out, in)
    b = jax.random.uniform(kb, (OUT_FEATURES,), jnp.float32, -bound, bound)

    x = jax.random.normal(kx, (BATCH, IN_FEATURES), jnp.float32)

    # One-time weight prep (hoisted out of the forward path).
    w_t, b_p = prepare_params(w_pt, b)
    w_t, b_p = jax.block_until_ready((w_t, b_p))

    out = torchnet_forward(x, w_t, b_p, out_features=OUT_FEATURES)
    out = jax.block_until_ready(out)

    # Reference check against plain JAX linear (same math as torch Linear).
    ref = x @ w_pt.T + b
    assert out.shape == (BATCH, OUT_FEATURES)
    assert jnp.allclose(out, ref, atol=1e-5, rtol=1e-5)

    print("KERNEL_OK")
</pallas_src>

<mosaic_0001>
module attributes {stable_mosaic.version = 11 : i64} {
  func.func @linear_kernel(%arg0: memref<8x128xf32, #tpu.memory_space<vmem>>, %arg1: memref<128x128xf32, #tpu.memory_space<vmem>>, %arg2: memref<1x128xf32, #tpu.memory_space<vmem>>, %arg3: memref<8x128xf32, #tpu.memory_space<vmem>>) attributes {dimension_semantics = [], scalar_prefetch = 0 : i64, scratch_operands = 0 : i64, tpu.core_type = #tpu.core_type<tc>} {
    %c0 = arith.constant 0 : index
    %c0_0 = arith.constant 0 : index
    %0 = vector.load %arg0[%c0, %c0_0] : memref<8x128xf32, #tpu.memory_space<vmem>>, vector<8x128xf32>
    %c0_1 = arith.constant 0 : index
    %c0_2 = arith.constant 0 : index
    %1 = vector.load %arg1[%c0_1, %c0_2] : memref<128x128xf32, #tpu.memory_space<vmem>>, vector<128x128xf32>
    %cst = arith.constant dense<0.000000e+00> : vector<8x128xf32>
    %2 = tpu.matmul %0, %1, %cst {dimension_numbers = #tpu.dot_dimension_numbers<[1], [0], [0], [1], [0, 0, 1, 1], [], []>} : vector<8x128xf32>, vector<128x128xf32>, vector<8x128xf32> -> vector<8x128xf32>
    %c0_3 = arith.constant 0 : index
    %c0_4 = arith.constant 0 : index
    %3 = vector.load %arg2[%c0_3, %c0_4] : memref<1x128xf32, #tpu.memory_space<vmem>>, vector<1x128xf32>
    %4 = vector.broadcast %3 : vector<1x128xf32> to vector<8x128xf32>
    %5 = arith.addf %2, %4 : vector<8x128xf32>
    %c0_5 = arith.constant 0 : index
    %c0_6 = arith.constant 0 : index
    %6 = vector.load %arg3[%c0_5, %c0_6] : memref<8x128xf32, #tpu.memory_space<vmem>>, vector<8x128xf32>
    tpu.vector_store %arg3[%c0_5, %c0_6], %5 {strides = array<i32>} : memref<8x128xf32, #tpu.memory_space<vmem>>, vector<8x128xf32>,
    return
  }
}

</mosaic_0001>

<llo_original>
// kernel: torchnet_forward.1
$region0: #{torchnet_forward.1}
  #allocation0 [shape = 'u32[]', space=smem, size = 0x4, offset = 0x4, fixed_abs, tag = 'smem constant byte address 0x4 - core index']
  #allocation1 [shape = 'u32[72,128]{1,0:T(1,128)}', space=vmem, size = 0x9000, scoped, tag = 'internal scratch']
  %s0 = inlined_call_operand.vmem [shape: f32[8,128], index: 0, kind: input, shape index: {}]
  %s1 = inlined_call_operand.hbm [shape: f32[128,128], index: 1, kind: input, shape index: {}]
  %s2 = inlined_call_operand.vmem [shape: f32[1,128], index: 2, kind: input, shape index: {}]
  %s3 = inlined_call_operand.hbm [shape: f32[8,128], index: 3, kind: output, shape index: {}]
  %s4 = sld [smem:[#allocation0]]
  $region26: #{torchnet_forward.1} parent=0
    _
  %s6 = ssub.s32 1, %s4
  %s7 = scalar_select 0, %s6, %s4
  $region1: #{torchnet_forward.1} parent=0
    #allocation2 [shape = 'u8[65536]{0}', space=vmem, size = 0x10000, scoped, tag = 'input window, operand 1, single buffered']
    #allocation3 [shape = 's32[1]{0}', space=sflag, size = 0x4, scoped, tag = 'scoped memory for torchnet_forward.1']
    #allocation4 [shape = 's32[1]{0}', space=sflag, size = 0x4, scoped, tag = 'scoped memory for torchnet_forward.1']
    #allocation5 [shape = 'u8[4096]{0}', space=vmem, size = 0x1000, scoped, tag = 'output window, operand 0, single buffered']
    %8 = vsyncpa [#allocation3], 0
    %9 = vsyncpa [#allocation4], 0
    // Predicated region
    $region2: #{torchnet_forward.1} parent=1 // pred_check
      _
    $region3: #{torchnet_forward.1} parent=1 // pred_check_branch
      %11 = sbr.rel (0) target = $region5
    $region4: #{torchnet_forward.1} parent=1 // pred_region
      _
    $region5: #{torchnet_forward.1} parent=1 // pred_fallthru
      _
    // Predicated region
    $region6: #{torchnet_forward.1} parent=1 // pred_check
      _
    $region7: #{torchnet_forward.1} parent=1 // pred_check_branch
      %13 = sbr.rel (0) target = $region9
    $region8: #{torchnet_forward.1} parent=1 // pred_region
      %15 = vsyncadd [#allocation3], 0
      %s16 = sshll.u32 %s1, 4
      %s17 = int_to_ptr.hbm [resolvable:$true] %s16
      %s18 = sshll.u32 [#allocation2], 4
      %s19 = int_to_ptr.vmem [resolvable:$true] %s18
      %24 = dma.hbm_to_vmem [thread:$0]  %s17, 2048, %s19, [#allocation3], 128, 128, 8
    $region9: #{torchnet_forward.1} parent=1 // pred_fallthru
      _
    // Predicated region
    $region10: #{torchnet_forward.1} parent=1 // pred_check
      _
    $region11: #{torchnet_forward.1} parent=1 // pred_check_branch
      %26 = sbr.rel (0) target = $region13
    $region12: #{torchnet_forward.1} parent=1 // pred_region
      _
    $region13: #{torchnet_forward.1} parent=1 // pred_fallthru
      _
    // Predicated region
    $region14: #{torchnet_forward.1} parent=1 // pred_check
      _
    $region15: #{torchnet_forward.1} parent=1 // pred_check_branch
      %28 = sbr.rel (0) target = $region17
    $region16: #{torchnet_forward.1} parent=1 // pred_region
      %30 = dma.done [#allocation3], 2048
    $region17: #{torchnet_forward.1} parent=1 // pred_fallthru
      _
    %v31 = vld [vmem:[%s0] sm:$0xff]
    %v32 = vld [vmem:[#allocation2] sm:$0xff]
    %v33 = vld [vmem:[#allocation2 + $0x8] sm:$0xff]
    %v34 = vld [vmem:[#allocation2 + $0x10] sm:$0xff]
    %v35 = vld [vmem:[#allocation2 + $0x18] sm:$0xff]
    %v36 = vld [vmem:[#allocation2 + $0x20] sm:$0xff]
    %v37 = vld [vmem:[#allocation2 + $0x28] sm:$0xff]
    %v38 = vld [vmem:[#allocation2 + $0x30] sm:$0xff]
    %v39 = vld [vmem:[#allocation2 + $0x38] sm:$0xff]
    %v40 = vld [vmem:[#allocation2 + $0x40] sm:$0xff]
    %v41 = vld [vmem:[#allocation2 + $0x48] sm:$0xff]
    %v42 = vld [vmem:[#allocation2 + $0x50] sm:$0xff]
    %v43 = vld [vmem:[#allocation2 + $0x58] sm:$0xff]
    %v44 = vld [vmem:[#allocation2 + $0x60] sm:$0xff]
    %v45 = vld [vmem:[#allocation2 + $0x68] sm:$0xff]
    %v46 = vld [vmem:[#allocation2 + $0x70] sm:$0xff]
    %v47 = vld [vmem:[#allocation2 + $0x78] sm:$0xff]
    %v48 = vld [vmem:[%s2] sm:$0x1]
    %v50 = vperm.slane %v48, 0
    %52 = vmatpush.msra.mxu0 %v47
    %53 = vmatpush.msra.mxu0 %v46
    %54 = vmatpush.msra.mxu0 %v45
    %55 = vmatpush.msra.mxu0 %v44
    %56 = vmatpush.msra.mxu0 %v43
    %57 = vmatpush.msra.mxu0 %v42
    %58 = vmatpush.msra.mxu0 %v41
    %59 = vmatpush.msra.mxu0 %v40
    %60 = vmatpush.msra.mxu0 %v39
    %61 = vmatpush.msra.mxu0 %v38
    %62 = vmatpush.msra.mxu0 %v37
    %63 = vmatpush.msra.mxu0 %v36
    %64 = vmatpush.msra.mxu0 %v35
    %65 = vmatpush.msra.mxu0 %v34
    %66 = vmatpush.msra.mxu0 %v33
    %67 = vmatpush.msra.mxu0 %v32
    %68 = vmatmul.f32.gmra.mxu0 %v31
    %v69 = vpop.f32.mrf.mxu0
    %v70 = vadd.f32 %v50, %v69
    %71 = vdwg.mxu0
    %72 = vst [vmem:[#allocation5] sm:$0xff] %v70
    // Predicated region
    $region18: #{torchnet_forward.1} parent=1 // pred_check
      _
    $region19: #{torchnet_forward.1} parent=1 // pred_check_branch
      %74 = sbr.rel (0) target = $region21
    $region20: #{torchnet_forward.1} parent=1 // pred_region
      %76 = vsyncadd [#allocation4], 0
      %s78 = sshll.u32 [#allocation5], 4
      %s79 = int_to_ptr.vmem [resolvable:$true] %s78
      %s80 = sshll.u32 %s3, 4
      %s81 = int_to_ptr.hbm [resolvable:$true] %s80
      %83 = dma.vmem_to_hbm [thread:$0]  %s79, 128, %s81, [#allocation4]
    $region21: #{torchnet_forward.1} parent=1 // pred_fallthru
      _
    // Predicated region
    $region22: #{torchnet_forward.1} parent=1 // pred_check
      _
    $region23: #{torchnet_forward.1} parent=1 // pred_check_branch
      %85 = sbr.rel (0) target = $region25
    $region24: #{torchnet_forward.1} parent=1 // pred_region
      %87 = dma.done [#allocation4], 128
    $region25: #{torchnet_forward.1} parent=1 // pred_fallthru
      _
    %88 = vsyncpa [#allocation3], 1
    %89 = vsyncpa [#allocation4], 1

</llo_original>
